<compile_context>
chip_gen: v6e
topology: v6e:2x2x1
jax: 0.10.0
libtpu: 0.0.40
codegen_flags: <defaults>
</compile_context>

<pallas_src>
import jax
import jax.numpy as jnp
from jax.experimental import pallas as pl
from jax.experimental.pallas import tpu as pltpu

EPS = 1e-10


def _l2norm_kernel(x_ref, w_ref, o_ref):
    # x_ref: (C, T)   w_ref: (C, 1)   o_ref: (C, T)
    x = x_ref[...].astype(jnp.float32)                         # (C, T)
    w = w_ref[...].astype(jnp.float32)                         # (C, 1)
    sq_sum = jnp.sum(x * x, axis=0, keepdims=True)             # (1, T) reduce over channels
    # eps added AFTER the sqrt (PyTorch ordering); exact reciprocal on the reduced slab.
    inv = pl.reciprocal(jnp.sqrt(sq_sum) + EPS, approx=False)  # (1, T)
    o_ref[...] = ((x * inv) * w).astype(o_ref.dtype)


def _round_down_128(v: int) -> int:
    return max(128, (v // 128) * 128)


def _choose_tile(HW: int, C: int, N: int, itemsize: int,
                 max_tile_hw: int, vmem_budget_bytes: int) -> int:
    # Per-step VMEM accounting, per lane column of the tile:
    #   double-buffered input  : 2 * C * itemsize
    #   double-buffered output : 2 * C * itemsize
    #   f32 cast of x + f32 pre-cast result temp : ~8 * C
    bytes_per_lane = C * (4 * itemsize + 8)
    t_cap = max(128, vmem_budget_bytes // bytes_per_lane)
    t_cap = _round_down_128(min(t_cap, max_tile_hw))

    if HW <= t_cap:
        t_hw = HW       # single full-extent block: always a legal block shape, no masking
    else:
        t_hw = t_cap    # multiple of 128; ragged last tile handled by edge-block masking

    # Keep enough grid steps for double-buffered DMA and both v7x TensorCores.
    while t_hw > 128 and N * pl.cdiv(HW, t_hw) < 8:
        t_hw = _round_down_128(t_hw // 2)
    return t_hw


def l2norm(x_nchw: jax.Array, weight: jax.Array, *,
           max_tile_hw: int = 2048,
           vmem_budget_bytes: int = 12 * 1024 * 1024) -> jax.Array:
    """x_nchw: (N, C, H, W), weight: (C,). Returns (N, C, H, W)."""
    N, C, H, W = x_nchw.shape
    HW = H * W
    itemsize = jnp.dtype(x_nchw.dtype).itemsize

    t_hw = _choose_tile(HW, C, N, itemsize, max_tile_hw, vmem_budget_bytes)
    n_hw_tiles = pl.cdiv(HW, t_hw)

    x3 = x_nchw.reshape(N, C, HW)   # contiguous reshape: no extra HBM pass
    w2 = weight.reshape(C, 1)

    cost = pl.CostEstimate(
        flops=4 * N * C * HW,
        transcendentals=2 * N * HW,
        bytes_accessed=2 * N * C * HW * itemsize + C * jnp.dtype(weight.dtype).itemsize,
    )

    out3 = pl.pallas_call(
        _l2norm_kernel,
        out_shape=jax.ShapeDtypeStruct((N, C, HW), x_nchw.dtype),
        grid_spec=pltpu.PrefetchScalarGridSpec(
            num_scalar_prefetch=0,
            grid=(N, n_hw_tiles),
            in_specs=[
                pl.BlockSpec((pl.Squeezed(), C, t_hw), lambda n, s: (n, 0, s)),
                pl.BlockSpec((C, 1), lambda n, s: (0, 0)),
            ],
            out_specs=pl.BlockSpec((pl.Squeezed(), C, t_hw), lambda n, s: (n, 0, s)),
        ),
        compiler_params=pltpu.CompilerParams(
            # Both axes are fully data-parallel -> megacore sharding on v7x.
            dimension_semantics=("parallel", "parallel"),
            # Raise v5e's 16 MiB scoped default; well under v7x's 64 MiB physical VMEM.
            vmem_limit_bytes=32 * 1024 * 1024,
        ),
        cost_estimate=cost,
    )(x3, w2)

    return out3.reshape(N, C, H, W)


def l2norm_reference(x_nchw: jax.Array, weight: jax.Array) -> jax.Array:
    norm = jnp.sqrt(jnp.sum(x_nchw.astype(jnp.float32) ** 2, axis=1, keepdims=True)) + EPS
    out = x_nchw.astype(jnp.float32) / norm
    return (weight.astype(jnp.float32)[None, :, None, None] * out).astype(x_nchw.dtype)


if __name__ == "__main__":
    # Module config: L2Norm(n_channels=C, scale=gamma). SSD uses (512, 20); small here.
    gamma = 20.0
    key_a, key_b = jax.random.split(jax.random.PRNGKey(0))

    # Primary small test: 128-aligned HW -> full-extent / aligned tiles.
    N, C, H, W = 2, 4, 16, 16
    x = jax.random.normal(key_a, (N, C, H, W), dtype=jnp.float32)
    # Deterministic parameter init, matching init.constant_(weight, gamma)
    weight = jnp.full((C,), gamma, dtype=jnp.float32)

    out = jax.block_until_ready(l2norm(x, weight))
    ref = l2norm_reference(x, weight)
    assert out.shape == (N, C, H, W)
    assert jnp.allclose(out, ref, atol=1e-5, rtol=1e-5), "mismatch vs reference (aligned)"

    # Non-128-aligned spatial map (SSD-style 19x19) -> exercises the ragged edge-block
    # path with no host-side pad/slice.
    x2 = jax.random.normal(key_b, (1, C, 19, 19), dtype=jnp.float32)
    out2 = jax.block_until_ready(l2norm(x2, weight))
    ref2 = l2norm_reference(x2, weight)
    assert jnp.allclose(out2, ref2, atol=1e-5, rtol=1e-5), "mismatch vs reference (ragged)"

    print("KERNEL_OK")
</pallas_src>

<mosaic_0001>
module attributes {stable_mosaic.version = 11 : i64} {
  func.func @_l2norm_kernel(%arg0: i32, %arg1: i32, %arg2: memref<1x4x128xf32, #tpu.memory_space<vmem>>, %arg3: memref<4x1xf32, #tpu.memory_space<vmem>>, %arg4: memref<1x4x128xf32, #tpu.memory_space<vmem>>) attributes {dimension_semantics = [#tpu.dimension_semantics<parallel>, #tpu.dimension_semantics<parallel>], iteration_bounds = array<i64: 2, 2>, scalar_prefetch = 0 : i64, scratch_operands = 0 : i64, tpu.core_type = #tpu.core_type<tc>, window_params = [{transform_indices = @transform_0, window_bounds = array<i64: 1, 4, 128>}, {pipeline_mode = #tpu.pipeline_mode<synchronous>, transform_indices = @transform_1, window_bounds = array<i64: 4, 1>}, {transform_indices = @transform_2, window_bounds = array<i64: 1, 4, 128>}]} {
    %c0 = arith.constant 0 : index
    %c0_0 = arith.constant 0 : index
    %c0_1 = arith.constant 0 : index
    %0 = vector.load %arg2[%c0, %c0_0, %c0_1] : memref<1x4x128xf32, #tpu.memory_space<vmem>>, vector<1x4x128xf32>
    %1 = vector.shape_cast %0 : vector<1x4x128xf32> to vector<4x128xf32>
    %c0_2 = arith.constant 0 : index
    %c0_3 = arith.constant 0 : index
    %2 = vector.load %arg3[%c0_2, %c0_3] : memref<4x1xf32, #tpu.memory_space<vmem>>, vector<4x1xf32>
    %3 = arith.mulf %1, %1 : vector<4x128xf32>
    %cst = arith.constant dense<0.000000e+00> : vector<128xf32>
    %4 = vector.multi_reduction <add>, %3, %cst [0] : vector<4x128xf32> to vector<128xf32>
    %5 = vector.shape_cast %4 : vector<128xf32> to vector<1x128xf32>
    %6 = math.sqrt %5 : vector<1x128xf32>
    %cst_4 = arith.constant 1.000000e-10 : f32
    %7 = vector.broadcast %cst_4 : f32 to vector<1x128xf32>
    %8 = arith.addf %6, %7 : vector<1x128xf32>
    %9 = tpu.reciprocal %8 : vector<1x128xf32> -> vector<1x128xf32>
    %10 = vector.broadcast %9 : vector<1x128xf32> to vector<4x128xf32>
    %11 = arith.mulf %1, %10 : vector<4x128xf32>
    %12 = vector.broadcast %2 : vector<4x1xf32> to vector<4x128xf32>
    %13 = arith.mulf %11, %12 : vector<4x128xf32>
    %c0_5 = arith.constant 0 : index
    %c0_6 = arith.constant 0 : index
    %c0_7 = arith.constant 0 : index
    %14 = vector.load %arg4[%c0_5, %c0_6, %c0_7] : memref<1x4x128xf32, #tpu.memory_space<vmem>>, vector<1x4x128xf32>
    %15 = vector.shape_cast %14 : vector<1x4x128xf32> to vector<4x128xf32>
    %16 = vector.shape_cast %13 : vector<4x128xf32> to vector<1x4x128xf32>
    tpu.vector_store %arg4[%c0_5, %c0_6, %c0_7], %16 {strides = array<i32>} : memref<1x4x128xf32, #tpu.memory_space<vmem>>, vector<1x4x128xf32>,
    return
  }
  func.func @transform_0(%arg0: i32, %arg1: i32) -> (i32, i32, i32) {
    %c0_i32 = arith.constant 0 : i32
    %c0_i32_0 = arith.constant 0 : i32
    return %arg0, %c0_i32, %arg1 : i32, i32, i32
  }
  func.func @transform_1(%arg0: i32, %arg1: i32) -> (i32, i32) {
    %c0_i32 = arith.constant 0 : i32
    %c0_i32_0 = arith.constant 0 : i32
    %c0_i32_1 = arith.constant 0 : i32
    return %c0_i32, %c0_i32_0 : i32, i32
  }
  func.func @transform_2(%arg0: i32, %arg1: i32) -> (i32, i32, i32) {
    %c0_i32 = arith.constant 0 : i32
    %c0_i32_0 = arith.constant 0 : i32
    return %arg0, %c0_i32, %arg1 : i32, i32, i32
  }
}

</mosaic_0001>

<llo_original>
// kernel: tpu_custom_call.1
$region0: #{tpu_custom_call.1}
  #allocation0 [shape = 'u32[]', space=smem, size = 0x4, offset = 0x4, fixed_abs, tag = 'smem constant byte address 0x4 - core index']
  #allocation1 [shape = 'u32[144,128]{1,0:T(1,128)}', space=vmem, size = 0x12000, scoped, tag = 'internal scratch']
  %s0 = inlined_call_operand.hbm [shape: f32[2,4,256], index: 0, kind: input, shape index: {}]
  %s1 = inlined_call_operand.vmem [shape: f32[4,1], index: 1, kind: input, shape index: {}]
  %s2 = inlined_call_operand.hbm [shape: f32[2,4,256], index: 2, kind: output, shape index: {}]
  %s3 = sld [smem:[#allocation0]]
  $region45: #{tpu_custom_call.1} parent=0
    _
  %s5 = ssub.s32 1, %s3
  %s6 = scalar_select 0, %s5, %s3
  $region1: #{tpu_custom_call.1} parent=0
    #allocation2 [shape = 'u8[4096]{0}', space=vmem, size = 0x1000, scoped, tag = 'input window, operand 0']
    #allocation3 [shape = 's32[2]{0}', space=sflag, size = 0x8, scoped, tag = 'scoped memory for tpu_custom_call.1']
    #allocation4 [shape = 's32[2]{0}', space=sflag, size = 0x8, scoped, tag = 'scoped memory for tpu_custom_call.1']
    #allocation5 [shape = 'u8[4096]{0}', space=vmem, size = 0x1000, scoped, tag = 'output window, operand 0']
    %7 = vsyncpa [#allocation3], 0
    %s8 = scalar_lea.sflag [#allocation3], 1
    %9 = vsyncpa %s8, 0
    %10 = vsyncpa [#allocation4], 0
    %s11 = scalar_lea.sflag [#allocation4], 1
    %12 = vsyncpa %s11, 0
    loop: start=0, step=1, limit=6
    $region2: #{tpu_custom_call.1} parent=1 // loop_pre_header
      _
    $region3: #{tpu_custom_call.1} parent=1 // loop_header
      %s14 = sphi 0, %s18
      %p15 = scmp.ge.s32.totalorder %s14, 6
      %s21 = sphi 0, %s33
      %s22 = sphi 0, %s29
      %s23 = sphi 0, %s21
      %s24 = sphi 0, %s22
      %s25 = sphi 0, %s23
      %s26 = sphi 0, %s24
      %s38 = sphi 0, %s40
      %s41 = sphi 0, %s38
      %s42 = sphi 0, %s41
      %s58 = sphi 0, %s42
      %s62 = sphi 0, %s62
      %s64 = sphi 0, %s62
      %s65 = sphi 0, %s64
      %s79 = sphi 0, %s65
      %s87 = sphi 0, %s89
      %s90 = sphi 0, %s87
      %s91 = sphi 0, %s90
      %s107 = sphi 0, %s91
    $region4: #{tpu_custom_call.1} parent=1 // loop_header_branch
      %17 = sbr.rel (%p15) target = $region8
    $region5: #{tpu_custom_call.1} parent=1 // loop_body
      %s19 = ssub.s32 %s14, 1
      %s20 = ssub.s32 %s14, 2
      %s27 = sadd.s32 1, %s22
      %p28 = scmp.ge.s32.totalorder %s27, 2
      %s29 = scalar_select %p28, 0, %s27
      %s30 = sadd.s32 1, %s21
      %s31 = scalar_select %p28, %s30, %s21
      %p32 = scmp.ge.s32.totalorder %s31, 2
      %s33 = scalar_select %p32, 0, %s31
      %s34 = ssub.s32 %s21, %s33
      %s35 = ssub.s32 %s22, %s29
      %s36 = sor.u32 %s34, %s35
      %p37 = scmp.eq.s32.totalorder %s36, 0
      %s39 = sadd.s32 %s38, 1
      %s40 = scalar_select %p37, %s38, %s39
      %p43 = pneg %p37
      %p44 = scmp.eq.s32.totalorder %s14, 3
      %p45 = por %p43, %p44
      %p46 = scmp.ne.s32.totalorder %s38, %s41
      %p47 = scmp.eq.s32.totalorder %s14, 0
      %p48 = por %p46, %p47
      %p49 = scmp.ne.s32.totalorder %s38, %s41
      %p50 = scmp.eq.s32.totalorder %s19, 3
      %p51 = por %p49, %p50
      %p52 = scmp.ne.s32.totalorder %s41, %s42
      %p53 = scmp.eq.s32.totalorder %s19, 0
      %p54 = por %p52, %p53
      %p55 = scmp.ne.s32.totalorder %s41, %s42
      %p56 = scmp.eq.s32.totalorder %s20, 3
      %p57 = por %p55, %p56
      %p59 = scmp.ne.s32.totalorder %s42, %s58
      %p60 = scmp.eq.s32.totalorder %s20, 0
      %p61 = por %p59, %p60
      %s63 = sadd.s32 %s62, 1
      %p66 = scmp.eq.s32.totalorder %s14, 3
      %p67 = scmp.ne.s32.totalorder %s62, %s64
      %p68 = scmp.eq.s32.totalorder %s14, 0
      %p69 = por %p67, %p68
      %p70 = scmp.ne.s32.totalorder %s62, %s64
      %p71 = scmp.eq.s32.totalorder %s19, 3
      %p72 = por %p70, %p71
      %p73 = scmp.ne.s32.totalorder %s64, %s65
      %p74 = scmp.eq.s32.totalorder %s19, 0
      %p75 = por %p73, %p74
      %p76 = scmp.ne.s32.totalorder %s64, %s65
      %p77 = scmp.eq.s32.totalorder %s20, 3
      %p78 = por %p76, %p77
      %p80 = scmp.ne.s32.totalorder %s65, %s79
      %p81 = scmp.eq.s32.totalorder %s20, 0
      %p82 = por %p80, %p81
      %s83 = ssub.s32 %s21, %s33
      %s84 = ssub.s32 %s22, %s29
      %s85 = sor.u32 %s83, %s84
      %p86 = scmp.eq.s32.totalorder %s85, 0
      %s88 = sadd.s32 %s87, 1
      %s89 = scalar_select %p86, %s87, %s88
      %p92 = pneg %p86
      %p93 = scmp.eq.s32.totalorder %s14, 3
      %p94 = por %p92, %p93
      %p95 = scmp.ne.s32.totalorder %s87, %s90
      %p96 = scmp.eq.s32.totalorder %s14, 0
      %p97 = por %p95, %p96
      %p98 = scmp.ne.s32.totalorder %s87, %s90
      %p99 = scmp.eq.s32.totalorder %s19, 3
      %p100 = por %p98, %p99
      %p101 = scmp.ne.s32.totalorder %s90, %s91
      %p102 = scmp.eq.s32.totalorder %s19, 0
      %p103 = por %p101, %p102
      %p104 = scmp.ne.s32.totalorder %s90, %s91
      %p105 = scmp.eq.s32.totalorder %s20, 3
      %p106 = por %p104, %p105
      %p108 = scmp.ne.s32.totalorder %s91, %s107
      %p109 = scmp.eq.s32.totalorder %s20, 0
      %p110 = por %p108, %p109
      %p111 = scmp.le.s32.totalorder 1, %s14
      %p112 = scmp.lt.s32.totalorder %s14, 5
      %p113 = pnand %p111, %p112
      %p114 = pneg %p113
      // Predicated region
      $region9: #{tpu_custom_call.1} parent=5 // pred_check
        _
      $region10: #{tpu_custom_call.1} parent=5 // pred_check_branch
        %116 = sbr.rel (%p113) target = $region12
      $region11: #{tpu_custom_call.1} parent=5 // pred_region
        %s117 = ssub.s32 %s14, 1
        // Predicated region
        $region13: #{tpu_custom_call.1} parent=11 // pred_check
          %p118 = pneg %p75
        $region14: #{tpu_custom_call.1} parent=11 // pred_check_branch
          %120 = sbr.rel (%p118) target = $region16
        $region15: #{tpu_custom_call.1} parent=11 // pred_region
          _
        $region16: #{tpu_custom_call.1} parent=11 // pred_fallthru
          _
      $region12: #{tpu_custom_call.1} parent=5 // pred_fallthru
        _
      %p121 = scmp.lt.s32.totalorder %s14, 4
      // Predicated region
      $region17: #{tpu_custom_call.1} parent=5 // pred_check
        %p122 = pneg %p121
      $region18: #{tpu_custom_call.1} parent=5 // pred_check_branch
        %124 = sbr.rel (%p122) target = $region20
      $region19: #{tpu_custom_call.1} parent=5 // pred_region
        // Predicated region
        $region21: #{tpu_custom_call.1} parent=19 // pred_check
          %p125 = pneg %p48
        $region22: #{tpu_custom_call.1} parent=19 // pred_check_branch
          %127 = sbr.rel (%p125) target = $region24
        $region23: #{tpu_custom_call.1} parent=19 // pred_region
          %s128 = sand.u32 %s38, 1
          %s129 = scalar_lea.sflag [#allocation3], %s128
          %s130 = sand.u32 %s38, 1
          %s131 = smul.addr %s130, 4
          %s132 = scalar_lea.vmem [#allocation2], %s131
          %s134 = ssub.s32 64, 64
          %135 = vsyncadd %s129, %s134
          %s136 = smul.addr %s21, 2
          %s137 = sadd.s32 %s22, %s136
          %s138 = smul.addr %s137, 64
          %s139 = scalar_lea.hbm %s0, %s138
          %s141 = sshll.u32 %s132, 4
          %s142 = int_to_ptr.vmem [resolvable:$true] %s141
          %144 = dma.hbm_to_vmem [thread:$0]  %s139, 64, %s142, %s129
        $region24: #{tpu_custom_call.1} parent=19 // pred_fallthru
          _
      $region20: #{tpu_custom_call.1} parent=5 // pred_fallthru
        _
      %p145 = scmp.le.s32.totalorder 1, %s14
      %p146 = scmp.lt.s32.totalorder %s14, 5
      %p147 = pnand %p145, %p146
      %p148 = pneg %p147
      // Predicated region
      $region25: #{tpu_custom_call.1} parent=5 // pred_check
        _
      $region26: #{tpu_custom_call.1} parent=5 // pred_check_branch
        %150 = sbr.rel (%p147) target = $region28
      $region27: #{tpu_custom_call.1} parent=5 // pred_region
        %s151 = ssub.s32 %s14, 1
        %s152 = sand.u32 %s41, 1
        %s153 = scalar_lea.sflag [#allocation3], %s152
        %s154 = sand.u32 %s41, 1
        %s155 = smul.addr %s154, 4
        %s156 = scalar_lea.vmem [#allocation2], %s155
        // Predicated region
        $region29: #{tpu_custom_call.1} parent=27 // pred_check
          %p157 = pneg %p54
        $region30: #{tpu_custom_call.1} parent=27 // pred_check_branch
          %159 = sbr.rel (%p157) target = $region32
        $region31: #{tpu_custom_call.1} parent=27 // pred_region
          %160 = dma.done %s153, 64
        $region32: #{tpu_custom_call.1} parent=27 // pred_fallthru
          _
        %s161 = sand.u32 %s41, 1
        %s162 = scalar_lea.sflag [#allocation3], %s161
        %s163 = sand.u32 %s41, 1
        %s164 = smul.addr %s163, 4
        %s165 = scalar_lea.vmem [#allocation2], %s164
        %p166 = pneg %p54
        %p167 = pneg %p51
        %p168 = pneg %p75
        %p169 = pneg %p72
        %p170 = pneg %p103
        %p171 = pneg %p100
        %s172 = sand.u32 %s90, 1
        %s173 = scalar_lea.sflag [#allocation4], %s172
        %s174 = sand.u32 %s90, 1
        %s175 = smul.addr %s174, 4
        %s176 = scalar_lea.vmem [#allocation5], %s175
        %v177 = vld [vmem:[%s156] sm:$0xf]
        %v178 = vld [vmem:[%s1] sm:$0xf]
        %v179 = vmul.f32 %v177, %v177
        %vm180 = vcmask 1043456
        %v181 = vsel %vm180, %v179, 0.0
        %v182 = vrot.slane %v181, 4
        %v183 = vadd.f32 %v181, %v182
        %v184 = vrot.slane %v183, 2
        %v185 = vadd.f32 %v183, %v184
        %v186 = vrot.slane %v185, 1
        %v187 = vadd.f32 %v185, %v186
        %v188 = vrsqrt.pop %v187
        %v189 = vmul.f32 %v187, %v188
        %vm190 = vcmp.eq.f32.partialorder %v187, inf
        %v191 = vsel %vm190, %v187, %v189
        %vm192 = vcmp.eq.f32.partialorder %v187, 0.0
        %v193 = vand.u32 %v187, 2147483648
        %v194 = vsel %vm192, %v193, %v191
        %v195 = vadd.f32 %v194, 1e-10
        %v196 = vrcp.pop %v195
        %v197 = vmul.f32 %v177, %v196
        %199 = vset.pattern.permute.xlu0 0
        %200 = vperm.xlu0 %199, %v178
        %v201 = vpop.permute.xlu0 %200
        %v203 = vmul.f32 %v197, %v201
        %204 = vst [vmem:[%s176] sm:$0xf] %v203
        %s205 = sand.u32 %s90, 1
        %s206 = scalar_lea.sflag [#allocation4], %s205
        %s207 = sand.u32 %s90, 1
        %s208 = smul.addr %s207, 4
        %s209 = scalar_lea.vmem [#allocation5], %s208
        // Predicated region
        $region33: #{tpu_custom_call.1} parent=27 // pred_check
          %p210 = pneg %p100
        $region34: #{tpu_custom_call.1} parent=27 // pred_check_branch
          %212 = sbr.rel (%p210) target = $region36
        $region35: #{tpu_custom_call.1} parent=27 // pred_region
          %s214 = ssub.s32 64, 64
          %215 = vsyncadd %s206, %s214
          %s216 = smul.addr %s23, 2
          %s217 = sadd.s32 %s24, %s216
          %s218 = smul.addr %s217, 64
          %s219 = scalar_lea.hbm %s2, %s218
          %s221 = sshll.u32 %s209, 4
          %s222 = int_to_ptr.vmem [resolvable:$true] %s221
          %224 = dma.vmem_to_hbm [thread:$0]  %s222, 64, %s219, %s206
        $region36: #{tpu_custom_call.1} parent=27 // pred_fallthru
          _
      $region28: #{tpu_custom_call.1} parent=5 // pred_fallthru
        _
      %p225 = scmp.le.s32.totalorder 2, %s14
      // Predicated region
      $region37: #{tpu_custom_call.1} parent=5 // pred_check
        %p226 = pneg %p225
      $region38: #{tpu_custom_call.1} parent=5 // pred_check_branch
        %228 = sbr.rel (%p226) target = $region40
      $region39: #{tpu_custom_call.1} parent=5 // pred_region
        %s229 = ssub.s32 %s14, 2
        // Predicated region
        $region41: #{tpu_custom_call.1} parent=39 // pred_check
          %p230 = pneg %p106
        $region42: #{tpu_custom_call.1} parent=39 // pred_check_branch
          %232 = sbr.rel (%p230) target = $region44
        $region43: #{tpu_custom_call.1} parent=39 // pred_region
          %s233 = sand.u32 %s91, 1
          %s234 = scalar_lea.sflag [#allocation4], %s233
          %s235 = sand.u32 %s91, 1
          %s236 = smul.addr %s235, 4
          %s237 = scalar_lea.vmem [#allocation5], %s236
          %238 = dma.done %s234, 64
        $region44: #{tpu_custom_call.1} parent=39 // pred_fallthru
          _
      $region40: #{tpu_custom_call.1} parent=5 // pred_fallthru
        _
    $region6: #{tpu_custom_call.1} parent=1 // loop_footer
      %s18 = sadd.s32 1, %s14
    $region7: #{tpu_custom_call.1} parent=1 // loop_footer_branch
      %13 = sbr.rel target = $region3
    $region8: #{tpu_custom_call.1} parent=1 // loop_exit
      _
    %239 = vsyncpa [#allocation3], 1
    %s240 = scalar_lea.sflag [#allocation3], 1
    %241 = vsyncpa %s240, 1
    %242 = vsyncpa [#allocation4], 1
    %s243 = scalar_lea.sflag [#allocation4], 1
    %244 = vsyncpa %s243, 1

</llo_original>
